<compile_context>
chip_gen: v5e
topology: v5e:2x2
jax: 0.10.0
libtpu: 0.0.40
codegen_flags: <defaults>
</compile_context>

<pallas_src>
import functools

import jax
import jax.numpy as jnp
from jax import lax
from jax.experimental import pallas as pl
from jax.experimental.pallas import tpu as pltpu


def _round_up(x, m):
    return ((x + m - 1) // m) * m


def _make_fc_kernel(use_activation):
    def kernel(x_ref, w_ref, b_ref, o_ref, acc_ref):
        # --- init accumulator on first K step -------------------------------
        @pl.when(pl.program_id(2) == 0)
        def _():
            acc_ref[...] = jnp.zeros_like(acc_ref)

        xv = x_ref[...]
        if use_activation:
            # tanh in f32 (EUP path legal on v5e), cast back to native dtype so
            # the MXU sees narrow operands on v6e/v7x.
            xv = jnp.tanh(xv.astype(jnp.float32)).astype(x_ref.dtype)

        # weight tile is [tn, tk] (PyTorch layout); contract K of both sides.
        acc_ref[...] += lax.dot_general(
            xv, w_ref[...],
            dimension_numbers=(((1,), (1,)), ((), ())),
            preferred_element_type=jnp.float32,
        )

        # --- finalize: bias add + cast + store on last K step ---------------
        @pl.when(pl.program_id(2) == pl.num_programs(2) - 1)
        def _():
            o_ref[...] = (acc_ref[...] + b_ref[...].astype(jnp.float32)
                          ).astype(o_ref.dtype)

    return kernel


@functools.partial(jax.jit, static_argnames=("use_activation",
                                             "block_m", "block_n", "block_k"))
def fc_layer(x, weight, bias, *, use_activation=True,
             block_m=256, block_n=256, block_k=512):
    """x: [M, K]; weight: [N, K] (PyTorch nn.Linear layout); bias: [N]."""
    M, K = x.shape
    N, K2 = weight.shape
    assert K == K2 and bias.shape == (N,)

    # Tile sizes: cap at the (padded) problem size, keep MXU/layout alignment.
    tm = min(block_m, _round_up(M, 8))
    tn = min(block_n, _round_up(N, 128))   # lane-dense output tile
    tk = min(block_k, _round_up(K, 128))

    Mp = _round_up(M, tm)
    Np = _round_up(N, tn)
    Kp = _round_up(K, tk)

    xp = x if (Mp, Kp) == (M, K) else jnp.pad(x, ((0, Mp - M), (0, Kp - K)))
    wp = weight if (Np, Kp) == (N, K) else jnp.pad(
        weight, ((0, Np - N), (0, Kp - K)))
    bp = bias if Np == N else jnp.pad(bias, (0, Np - N))
    b2d = bp.reshape(1, Np)

    grid = (Mp // tm, Np // tn, Kp // tk)
    kernel = _make_fc_kernel(use_activation)

    dsize = jnp.dtype(x.dtype).itemsize
    cost = pl.CostEstimate(
        flops=2 * Mp * Np * Kp,
        transcendentals=Mp * Kp if use_activation else 0,
        bytes_accessed=(Mp * Kp + Np * Kp + Mp * Np) * dsize + Np * 4,
    )

    out = pl.pallas_call(
        kernel,
        out_shape=jax.ShapeDtypeStruct((Mp, Np), x.dtype),
        grid_spec=pltpu.PrefetchScalarGridSpec(
            num_scalar_prefetch=0,
            grid=grid,
            in_specs=[
                pl.BlockSpec((tm, tk), lambda i, j, k: (i, k)),   # x tile
                pl.BlockSpec((tn, tk), lambda i, j, k: (j, k)),   # W tile [N,K]
                pl.BlockSpec((1, tn), lambda i, j, k: (0, j)),    # bias tile
            ],
            out_specs=pl.BlockSpec((tm, tn), lambda i, j, k: (i, j)),
            scratch_shapes=[pltpu.VMEM((tm, tn), jnp.float32)],
        ),
        compiler_params=pltpu.CompilerParams(
            dimension_semantics=("parallel", "parallel", "arbitrary")),
        cost_estimate=cost,
    )(xp, wp, b2d)

    if (Mp, Np) != (M, N):
        out = out[:M, :N]
    return out


def fc_layer_ref(x, weight, bias, *, use_activation=True):
    h = jnp.tanh(x) if use_activation else x
    return h @ weight.T + bias


def _run_case(key, M, K, N, dtype, use_activation, atol):
    kx, kw, kb = jax.random.split(key, 3)
    x = jax.random.normal(kx, (M, K), dtype=jnp.float32).astype(dtype)
    bound = 1.0 / (K ** 0.5)
    weight = jax.random.uniform(kw, (N, K), minval=-bound, maxval=bound,
                                dtype=jnp.float32).astype(dtype)
    bias = jax.random.uniform(kb, (N,), minval=-bound, maxval=bound,
                              dtype=jnp.float32).astype(dtype)

    out = fc_layer(x, weight, bias, use_activation=use_activation)
    out = jax.block_until_ready(out)
    ref = fc_layer_ref(x.astype(jnp.float32), weight.astype(jnp.float32),
                       bias.astype(jnp.float32), use_activation=use_activation)
    assert out.shape == (M, N)
    assert jnp.allclose(out.astype(jnp.float32), ref, atol=atol, rtol=1e-3), (
        f"mismatch M={M} K={K} N={N} act={use_activation}")


if __name__ == "__main__":
    key = jax.random.PRNGKey(0)
    k1, k2, k3 = jax.random.split(key, 3)

    # Small shapes consistent with FCLayer(input_dim, output_dim).
    _run_case(k1, M=8, K=32, N=32, dtype=jnp.float32,
              use_activation=True, atol=1e-5)

    # Ragged / multi-tile case exercising M, N, K padding and the K-loop.
    _run_case(k2, M=520, K=384, N=260, dtype=jnp.float32,
              use_activation=True, atol=1e-4)

    # No-activation path.
    _run_case(k3, M=64, K=256, N=130, dtype=jnp.float32,
              use_activation=False, atol=1e-4)

    print("KERNEL_OK")
</pallas_src>

<mosaic_0001>
module attributes {stable_mosaic.version = 11 : i64} {
  func.func @kernel(%arg0: i32, %arg1: i32, %arg2: i32, %arg3: memref<8x128xf32, #tpu.memory_space<vmem>>, %arg4: memref<128x128xf32, #tpu.memory_space<vmem>>, %arg5: memref<1x128xf32, #tpu.memory_space<vmem>>, %arg6: memref<8x128xf32, #tpu.memory_space<vmem>>, %arg7: memref<8x128xf32, #tpu.memory_space<vmem>>) attributes {dimension_semantics = [#tpu.dimension_semantics<parallel>, #tpu.dimension_semantics<parallel>, #tpu.dimension_semantics<arbitrary>], iteration_bounds = array<i64: 1, 1, 1>, scalar_prefetch = 0 : i64, scratch_operands = 1 : i64, tpu.core_type = #tpu.core_type<tc>, window_params = [{transform_indices = @transform_0, window_bounds = array<i64: 8, 128>}, {transform_indices = @transform_1, window_bounds = array<i64: 128, 128>}, {transform_indices = @transform_2, window_bounds = array<i64: 1, 128>}, {transform_indices = @transform_3, window_bounds = array<i64: 8, 128>}]} {
    %c0_i32 = arith.constant 0 : i32
    %0 = arith.cmpi eq, %arg2, %c0_i32 : i32
    %1 = arith.extui %0 : i1 to i32
    %c0_i32_0 = arith.constant 0 : i32
    %2 = arith.cmpi ne, %1, %c0_i32_0 : i32
    scf.if %2 {
      %cst_10 = arith.constant 0.000000e+00 : f32
      %13 = vector.broadcast %cst_10 : f32 to vector<8x128xf32>
      %c0_11 = arith.constant 0 : index
      %c0_12 = arith.constant 0 : index
      %14 = vector.load %arg7[%c0_11, %c0_12] : memref<8x128xf32, #tpu.memory_space<vmem>>, vector<8x128xf32>
      tpu.vector_store %arg7[%c0_11, %c0_12], %13 {strides = array<i32>} : memref<8x128xf32, #tpu.memory_space<vmem>>, vector<8x128xf32>,
    } else {
    }
    %c0 = arith.constant 0 : index
    %c0_1 = arith.constant 0 : index
    %3 = vector.load %arg3[%c0, %c0_1] : memref<8x128xf32, #tpu.memory_space<vmem>>, vector<8x128xf32>
    %4 = math.tanh %3 : vector<8x128xf32>
    %c0_2 = arith.constant 0 : index
    %c0_3 = arith.constant 0 : index
    %5 = vector.load %arg7[%c0_2, %c0_3] : memref<8x128xf32, #tpu.memory_space<vmem>>, vector<8x128xf32>
    %c0_4 = arith.constant 0 : index
    %c0_5 = arith.constant 0 : index
    %6 = vector.load %arg4[%c0_4, %c0_5] : memref<128x128xf32, #tpu.memory_space<vmem>>, vector<128x128xf32>
    %cst = arith.constant dense<0.000000e+00> : vector<8x128xf32>
    %7 = tpu.matmul %4, %6, %cst {dimension_numbers = #tpu.dot_dimension_numbers<[1], [1], [0], [0], [0, 0, 1, 0], [], []>} : vector<8x128xf32>, vector<128x128xf32>, vector<8x128xf32> -> vector<8x128xf32>
    %8 = arith.addf %5, %7 : vector<8x128xf32>
    %c0_6 = arith.constant 0 : index
    %c0_7 = arith.constant 0 : index
    %9 = vector.load %arg7[%c0_6, %c0_7] : memref<8x128xf32, #tpu.memory_space<vmem>>, vector<8x128xf32>
    tpu.vector_store %arg7[%c0_6, %c0_7], %8 {strides = array<i32>} : memref<8x128xf32, #tpu.memory_space<vmem>>, vector<8x128xf32>,
    %c0_i32_8 = arith.constant 0 : i32
    %10 = arith.cmpi eq, %arg2, %c0_i32_8 : i32
    %11 = arith.extui %10 : i1 to i32
    %c0_i32_9 = arith.constant 0 : i32
    %12 = arith.cmpi ne, %11, %c0_i32_9 : i32
    scf.if %12 {
      %c0_10 = arith.constant 0 : index
      %c0_11 = arith.constant 0 : index
      %13 = vector.load %arg7[%c0_10, %c0_11] : memref<8x128xf32, #tpu.memory_space<vmem>>, vector<8x128xf32>
      %c0_12 = arith.constant 0 : index
      %c0_13 = arith.constant 0 : index
      %14 = vector.load %arg5[%c0_12, %c0_13] : memref<1x128xf32, #tpu.memory_space<vmem>>, vector<1x128xf32>
      %15 = vector.broadcast %14 : vector<1x128xf32> to vector<8x128xf32>
      %16 = arith.addf %13, %15 : vector<8x128xf32>
      %c0_14 = arith.constant 0 : index
      %c0_15 = arith.constant 0 : index
      %17 = vector.load %arg6[%c0_14, %c0_15] : memref<8x128xf32, #tpu.memory_space<vmem>>, vector<8x128xf32>
      tpu.vector_store %arg6[%c0_14, %c0_15], %16 {strides = array<i32>} : memref<8x128xf32, #tpu.memory_space<vmem>>, vector<8x128xf32>,
    } else {
    }
    return
  }
  func.func @transform_0(%arg0: i32, %arg1: i32, %arg2: i32) -> (i32, i32) {
    %c0_i32 = arith.constant 0 : i32
    return %arg0, %arg2 : i32, i32
  }
  func.func @transform_1(%arg0: i32, %arg1: i32, %arg2: i32) -> (i32, i32) {
    %c0_i32 = arith.constant 0 : i32
    return %arg1, %arg2 : i32, i32
  }
  func.func @transform_2(%arg0: i32, %arg1: i32, %arg2: i32) -> (i32, i32) {
    %c0_i32 = arith.constant 0 : i32
    %c0_i32_0 = arith.constant 0 : i32
    return %c0_i32, %arg1 : i32, i32
  }
  func.func @transform_3(%arg0: i32, %arg1: i32, %arg2: i32) -> (i32, i32) {
    %c0_i32 = arith.constant 0 : i32
    return %arg0, %arg1 : i32, i32
  }
}

</mosaic_0001>

<llo_original>
// kernel: fc_layer.1
$region0: #{fc_layer.1}
  #allocation0 [shape = 'u32[]', space=smem, size = 0x4, offset = 0x4, fixed_abs, tag = 'smem constant byte address 0x4 - core index']
  #allocation1 [shape = 'u32[72,128]{1,0:T(1,128)}', space=vmem, size = 0x9000, scoped, tag = 'internal scratch']
  #allocation2 [shape = 'f32[8,128]{1,0:T(8,128)}', space=vmem, size = 0x1000, scoped, tag = 'scratch operand']
  %s0 = inlined_call_operand.vmem [shape: f32[8,128], index: 0, kind: input, shape index: {}]
  %s1 = inlined_call_operand.vmem [shape: f32[128,128], index: 1, kind: input, shape index: {}]
  %s2 = inlined_call_operand.vmem [shape: f32[1,128], index: 2, kind: input, shape index: {}]
  %s3 = inlined_call_operand.hbm [shape: f32[8,128], index: 3, kind: output, shape index: {}]
  %s4 = sld [smem:[#allocation0]]
  $region30: #{fc_layer.1} parent=0
    _
  %s6 = ssub.s32 1, %s4
  %s7 = scalar_select 0, %s6, %s4
  $region1: #{fc_layer.1} parent=0
    #allocation3 [shape = 'u8[4096]{0}', space=vmem, size = 0x1000, scoped, tag = 'output window, operand 0, single buffered']
    #allocation4 [shape = 's32[1]{0}', space=sflag, size = 0x4, scoped, tag = 'scoped memory for fc_layer.1']
    %8 = vsyncpa [#allocation4], 0
    // Predicated region
    $region2: #{fc_layer.1} parent=1 // pred_check
      _
    $region3: #{fc_layer.1} parent=1 // pred_check_branch
      %10 = sbr.rel (0) target = $region5
    $region4: #{fc_layer.1} parent=1 // pred_region
      _
    $region5: #{fc_layer.1} parent=1 // pred_fallthru
      _
    // Predicated region
    $region6: #{fc_layer.1} parent=1 // pred_check
      _
    $region7: #{fc_layer.1} parent=1 // pred_check_branch
      %12 = sbr.rel (0) target = $region9
    $region8: #{fc_layer.1} parent=1 // pred_region
      _
    $region9: #{fc_layer.1} parent=1 // pred_fallthru
      _
    // Predicated region
    $region10: #{fc_layer.1} parent=1 // pred_check
      _
    $region11: #{fc_layer.1} parent=1 // pred_check_branch
      %14 = sbr.rel (0) target = $region13
    $region12: #{fc_layer.1} parent=1 // pred_region
      _
    $region13: #{fc_layer.1} parent=1 // pred_fallthru
      _
    %p15 = scmp.eq.s32.totalorder 0, 0
    // Predicated region
    $region14: #{fc_layer.1} parent=1 // pred_check
      %p16 = pneg %p15
    $region15: #{fc_layer.1} parent=1 // pred_check_branch
      %18 = sbr.rel (%p16) target = $region17
    $region16: #{fc_layer.1} parent=1 // pred_region
      %19 = vst [vmem:[#allocation2] sm:$0xff] 0.0
    $region17: #{fc_layer.1} parent=1 // pred_fallthru
      _
    %v20 = vld [vmem:[%s0] sm:$0xff]
    %v21 = vtanh.pop %v20
    %v22 = vld [vmem:[#allocation2] sm:$0xff]
    %v23 = vld [vmem:[%s1] sm:$0xff]
    %v24 = vld [vmem:[%s1 + $0x8] sm:$0xff]
    %v25 = vld [vmem:[%s1 + $0x10] sm:$0xff]
    %v26 = vld [vmem:[%s1 + $0x18] sm:$0xff]
    %v27 = vld [vmem:[%s1 + $0x20] sm:$0xff]
    %v28 = vld [vmem:[%s1 + $0x28] sm:$0xff]
    %v29 = vld [vmem:[%s1 + $0x30] sm:$0xff]
    %v30 = vld [vmem:[%s1 + $0x38] sm:$0xff]
    %v31 = vld [vmem:[%s1 + $0x40] sm:$0xff]
    %v32 = vld [vmem:[%s1 + $0x48] sm:$0xff]
    %v33 = vld [vmem:[%s1 + $0x50] sm:$0xff]
    %v34 = vld [vmem:[%s1 + $0x58] sm:$0xff]
    %v35 = vld [vmem:[%s1 + $0x60] sm:$0xff]
    %v36 = vld [vmem:[%s1 + $0x68] sm:$0xff]
    %v37 = vld [vmem:[%s1 + $0x70] sm:$0xff]
    %v38 = vld [vmem:[%s1 + $0x78] sm:$0xff]
    %39 = vmatpush.xpose.msra.mxu0 %v38
    %40 = vmatpush.xpose.msra.mxu0 %v37
    %41 = vmatpush.xpose.msra.mxu0 %v36
    %42 = vmatpush.xpose.msra.mxu0 %v35
    %43 = vmatpush.xpose.msra.mxu0 %v34
    %44 = vmatpush.xpose.msra.mxu0 %v33
    %45 = vmatpush.xpose.msra.mxu0 %v32
    %46 = vmatpush.xpose.msra.mxu0 %v31
    %47 = vmatpush.xpose.msra.mxu0 %v30
    %48 = vmatpush.xpose.msra.mxu0 %v29
    %49 = vmatpush.xpose.msra.mxu0 %v28
    %50 = vmatpush.xpose.msra.mxu0 %v27
    %51 = vmatpush.xpose.msra.mxu0 %v26
    %52 = vmatpush.xpose.msra.mxu0 %v25
    %53 = vmatpush.xpose.msra.mxu0 %v24
    %54 = vmatpush.xpose.msra.mxu0 %v23
    %55 = vmatmul.f32.gmra.mxu0 %v21
    %v56 = vpop.f32.mrf.mxu0
    %v57 = vadd.f32 0.0, %v56
    %58 = vdwg.mxu0
    %v59 = vadd.f32 %v22, %v57
    %60 = vst [vmem:[#allocation2] sm:$0xff] %v59
    // Predicated region
    $region18: #{fc_layer.1} parent=1 // pred_check
      %p61 = pneg %p15
    $region19: #{fc_layer.1} parent=1 // pred_check_branch
      %63 = sbr.rel (%p61) target = $region21
    $region20: #{fc_layer.1} parent=1 // pred_region
      %v64 = vld [vmem:[#allocation2] sm:$0xff]
      %v65 = vld [vmem:[%s2] sm:$0x1]
      %v67 = vperm.slane %v65, 0
      %v69 = vadd.f32 %v64, %v67
      %70 = vst [vmem:[#allocation3] sm:$0xff] %v69
    $region21: #{fc_layer.1} parent=1 // pred_fallthru
      _
    // Predicated region
    $region22: #{fc_layer.1} parent=1 // pred_check
      _
    $region23: #{fc_layer.1} parent=1 // pred_check_branch
      %72 = sbr.rel (0) target = $region25
    $region24: #{fc_layer.1} parent=1 // pred_region
      %74 = vsyncadd [#allocation4], 0
      %s76 = sshll.u32 [#allocation3], 4
      %s77 = int_to_ptr.vmem [resolvable:$true] %s76
      %s78 = sshll.u32 %s3, 4
      %s79 = int_to_ptr.hbm [resolvable:$true] %s78
      %81 = dma.vmem_to_hbm [thread:$0]  %s77, 128, %s79, [#allocation4]
    $region25: #{fc_layer.1} parent=1 // pred_fallthru
      _
    // Predicated region
    $region26: #{fc_layer.1} parent=1 // pred_check
      _
    $region27: #{fc_layer.1} parent=1 // pred_check_branch
      %83 = sbr.rel (0) target = $region29
    $region28: #{fc_layer.1} parent=1 // pred_region
      %85 = dma.done [#allocation4], 128
    $region29: #{fc_layer.1} parent=1 // pred_fallthru
      _
    %86 = vsyncpa [#allocation4], 1

</llo_original>
